<compile_context>
chip_gen: v6e
topology: v6e:2x2x1
jax: 0.10.0
libtpu: 0.0.40
codegen_flags: <defaults>
</compile_context>

<pallas_src>
import jax
import jax.numpy as jnp
from jax import lax
from jax.experimental import pallas as pl
from jax.experimental.pallas import tpu as pltpu

_EPS = 1e-5                      # nn.LayerNorm default eps
_VMEM_LIMIT = 32 * 1024 * 1024   # explicit scoped-VMEM limit (safe on v5e/v6e/v7x)


# ----------------------------- tiling helper ---------------------------------
def _round_up(v, m):
    return ((v + m - 1) // m) * m


def _choose_row_tile(rows, d_in, d_out, *, max_tile=512,
                     vmem_budget=16 * 1024 * 1024):
    """Row-tile picker.

    * big tiles (amortize the ~0.35us/grid-step overhead, feed the MXU an
      M >= 128 slab),
    * multiple of 8 (sublane constraint) unless the block covers all rows,
    * keep >= 2 grid blocks when there is enough work (v7x has 2 TensorCores),
    * capped by a conservative double-buffered VMEM budget (v7x: 64 MiB/TC).
    """
    if rows <= 16:
        return rows                                   # full-extent block
    tr = min(max_tile, rows)
    # keep at least two parallel grid blocks (megacore / v7x dual-TC)
    tr = min(tr, _round_up(pl.cdiv(rows, 2), 8))
    tr = max(8, (tr // 8) * 8)                        # sublane multiple of 8

    def tile_bytes(t):  # double-buffered input tile + output tile (f32 bound)
        return 2 * t * d_in * 4 + 2 * t * d_out * 4

    while tr > 8 and tile_bytes(tr) > vmem_budget:
        tr = max(8, ((tr // 2) // 8) * 8)
    return tr


# ----------------------- fused LayerNorm + Linear kernel ----------------------
def _ln_linear_kernel(x_ref, g_ref, b_ref, w_ref, bias_ref, o_ref):
    # LayerNorm statistics in f32 on the row tile (in-register, never to HBM).
    x = x_ref[...].astype(jnp.float32)
    mean = jnp.mean(x, axis=-1, keepdims=True)
    xc = x - mean
    var = jnp.mean(xc * xc, axis=-1, keepdims=True)
    inv = lax.rsqrt(var + _EPS)
    xn = xc * inv * g_ref[...] + b_ref[...]           # gamma/beta pre-cast f32

    # MXU matmul: bf16 operands, f32 accumulation.
    acc = jnp.dot(xn.astype(w_ref.dtype), w_ref[...],
                  preferred_element_type=jnp.float32)
    o_ref[...] = (acc + bias_ref[...]).astype(o_ref.dtype)


def ln_linear_pallas(x, gamma, beta, w, b, *, max_row_tile=512,
                     compute_dtype=jnp.bfloat16):
    """Computes (LayerNorm(x) @ w + b) in a single fused Pallas kernel."""
    orig_shape = x.shape
    d_in = orig_shape[-1]
    d_out = w.shape[1]
    x2 = x.reshape(-1, d_in)
    rows = x2.shape[0]
    tr = _choose_row_tile(rows, d_in, d_out, max_tile=max_row_tile)
    grid = (pl.cdiv(rows, tr),)

    # Hoisted parameter prep: weight cast to bf16 once, LN params / bias in f32.
    w_c = w.astype(compute_dtype)
    gamma2 = gamma.reshape(1, d_in).astype(jnp.float32)
    beta2 = beta.reshape(1, d_in).astype(jnp.float32)
    bias2 = b.reshape(1, d_out).astype(jnp.float32)

    # NOTE: for large d_in / d_out add a K-reduction ("arbitrary") axis with an
    # f32 VMEM accumulator and a parallel N axis; at these sizes the whole
    # weight is resident in VMEM so a single grid axis over rows is optimal.
    out = pl.pallas_call(
        _ln_linear_kernel,
        out_shape=jax.ShapeDtypeStruct((rows, d_out), x.dtype),
        grid_spec=pltpu.PrefetchScalarGridSpec(
            num_scalar_prefetch=0,
            grid=grid,
            in_specs=[
                pl.BlockSpec((tr, d_in), lambda i: (i, 0)),      # x rows tile
                pl.BlockSpec((1, d_in), lambda i: (0, 0)),       # gamma
                pl.BlockSpec((1, d_in), lambda i: (0, 0)),       # beta
                pl.BlockSpec((d_in, d_out), lambda i: (0, 0)),   # weight (bf16)
                pl.BlockSpec((1, d_out), lambda i: (0, 0)),      # bias
            ],
            out_specs=pl.BlockSpec((tr, d_out), lambda i: (i, 0)),
        ),
        compiler_params=pltpu.CompilerParams(
            dimension_semantics=("parallel",),
            vmem_limit_bytes=_VMEM_LIMIT),
    )(x2, gamma2, beta2, w_c, bias2)
    return out.reshape(orig_shape[:-1] + (d_out,))


# ---------------- standalone LayerNorm kernel (generic fallback) --------------
def _layernorm_kernel(x_ref, g_ref, b_ref, o_ref):
    x = x_ref[...].astype(jnp.float32)
    mean = jnp.mean(x, axis=-1, keepdims=True)
    xc = x - mean
    var = jnp.mean(xc * xc, axis=-1, keepdims=True)
    inv = lax.rsqrt(var + _EPS)
    o_ref[...] = (xc * inv * g_ref[...] + b_ref[...]).astype(o_ref.dtype)


def layernorm_pallas(x, gamma, beta, *, max_row_tile=1024):
    """Plain LayerNorm over the last dim (used when `fn` cannot be fused)."""
    orig_shape = x.shape
    d = orig_shape[-1]
    x2 = x.reshape(-1, d)
    rows = x2.shape[0]
    tr = _choose_row_tile(rows, d, d, max_tile=max_row_tile)
    grid = (pl.cdiv(rows, tr),)
    gamma2 = gamma.reshape(1, d).astype(jnp.float32)
    beta2 = beta.reshape(1, d).astype(jnp.float32)
    # (input_output_aliases={0: 0} would write in place when x is dead after
    #  this call; not used here because the caller reuses x.)
    out = pl.pallas_call(
        _layernorm_kernel,
        out_shape=jax.ShapeDtypeStruct((rows, d), x.dtype),
        grid_spec=pltpu.PrefetchScalarGridSpec(
            num_scalar_prefetch=0,
            grid=grid,
            in_specs=[
                pl.BlockSpec((tr, d), lambda i: (i, 0)),
                pl.BlockSpec((1, d), lambda i: (0, 0)),
                pl.BlockSpec((1, d), lambda i: (0, 0)),
            ],
            out_specs=pl.BlockSpec((tr, d), lambda i: (i, 0)),
        ),
        compiler_params=pltpu.CompilerParams(
            dimension_semantics=("parallel",),
            vmem_limit_bytes=_VMEM_LIMIT),
    )(x2, gamma2, beta2)
    return out.reshape(orig_shape)


# ---------------------------------- PreNorm -----------------------------------
class PreNormPallas:
    """Pallas port of PreNorm.

    The LayerNorm(s) are fused into `fn`'s entry matmuls: `fn` receives the raw
    tensors together with the LN parameters and applies `ln_linear_pallas`,
    which normalizes each row tile in-register right before the MXU matmul.
    Mathematically identical to `fn(LayerNorm(x), context=LayerNorm(context))`
    but with half the pallas_calls and no HBM round trip of normed activations.
    """

    def __init__(self, dim, fn, context_dim=None):
        self.fn = fn
        self.dim = dim
        self.context_dim = context_dim
        # nn.LayerNorm default init: weight = ones, bias = zeros (deterministic)
        self.g = jnp.ones((dim,), jnp.float32)
        self.b = jnp.zeros((dim,), jnp.float32)
        if context_dim is not None:
            self.gc = jnp.ones((context_dim,), jnp.float32)
            self.bc = jnp.zeros((context_dim,), jnp.float32)

    def __call__(self, x, **kwargs):
        if self.context_dim is not None:
            kwargs = dict(kwargs, context_ln=(self.gc, self.bc))
        return self.fn(x, (self.g, self.b), **kwargs)


# ------------------------------------ main -------------------------------------
if __name__ == "__main__":
    key = jax.random.PRNGKey(0)
    kx, kc, kw1, kw2, kb1, kb2 = jax.random.split(key, 6)

    # Lane-dense dims (multiples of 128) and enough rows for 2 parallel blocks.
    B, N, D = 2, 256, 128       # x:       (batch, seq, dim)
    M, Dc = 256, 256            # context: (batch, ctx_seq, context_dim)

    x = jax.random.normal(kx, (B, N, D), jnp.float32)
    context = jax.random.normal(kc, (B, M, Dc), jnp.float32)

    # Synthetic user-supplied `fn` (in the original model this is e.g. cross
    # attention); its entry matmuls fuse the PreNorm LayerNorms.
    Wq = jax.random.normal(kw1, (D, D), jnp.float32) * 0.05
    bq = jax.random.normal(kb1, (D,), jnp.float32) * 0.05
    Wk = jax.random.normal(kw2, (Dc, D), jnp.float32) * 0.05
    bk = jax.random.normal(kb2, (D,), jnp.float32) * 0.05

    def fn(x, x_ln, context=None, context_ln=None):
        y = ln_linear_pallas(x, x_ln[0], x_ln[1], Wq, bq)                 # (B,N,D)
        ctx = ln_linear_pallas(context, context_ln[0], context_ln[1], Wk, bk)
        return y + jnp.mean(ctx, axis=1, keepdims=True)   # tiny glue reduction

    prenorm = PreNormPallas(D, fn, context_dim=Dc)
    out = jax.block_until_ready(prenorm(x, context=context))

    # ----------------------- pure-JAX reference ------------------------------
    def ln_ref(v, g, b):
        mu = v.mean(-1, keepdims=True)
        var = ((v - mu) ** 2).mean(-1, keepdims=True)
        return (v - mu) / jnp.sqrt(var + _EPS) * g + b

    xr = ln_ref(x, prenorm.g, prenorm.b)
    cr = ln_ref(context, prenorm.gc, prenorm.bc)
    # Match the kernel's mixed precision: bf16 operands, f32 accumulation.
    y_ref = jnp.einsum('bnd,de->bne', xr.astype(jnp.bfloat16),
                       Wq.astype(jnp.bfloat16),
                       preferred_element_type=jnp.float32) + bq
    c_ref = jnp.einsum('bmd,de->bme', cr.astype(jnp.bfloat16),
                       Wk.astype(jnp.bfloat16),
                       preferred_element_type=jnp.float32) + bk
    ref = y_ref + jnp.mean(c_ref, axis=1, keepdims=True)

    assert out.shape == (B, N, D)
    err = float(jnp.max(jnp.abs(out - ref)))
    assert jnp.allclose(out, ref, atol=2e-2, rtol=2e-2), err

    # Also validate the standalone (unfused) LayerNorm kernel path.
    xn_k = jax.block_until_ready(layernorm_pallas(x, prenorm.g, prenorm.b))
    assert jnp.allclose(xn_k, xr, atol=1e-4, rtol=1e-4), float(
        jnp.max(jnp.abs(xn_k - xr)))

    print("KERNEL_OK")
</pallas_src>

<mosaic_0001>
module attributes {stable_mosaic.version = 11 : i64} {
  func.func @_ln_linear_kernel(%arg0: i32, %arg1: memref<256x128xf32, #tpu.memory_space<vmem>>, %arg2: memref<1x128xf32, #tpu.memory_space<vmem>>, %arg3: memref<1x128xf32, #tpu.memory_space<vmem>>, %arg4: memref<128x128xbf16, #tpu.memory_space<vmem>>, %arg5: memref<1x128xf32, #tpu.memory_space<vmem>>, %arg6: memref<256x128xf32, #tpu.memory_space<vmem>>) attributes {dimension_semantics = [#tpu.dimension_semantics<parallel>], iteration_bounds = array<i64: 2>, scalar_prefetch = 0 : i64, scratch_operands = 0 : i64, tpu.core_type = #tpu.core_type<tc>, window_params = [{transform_indices = @transform_0, window_bounds = array<i64: 256, 128>}, {pipeline_mode = #tpu.pipeline_mode<synchronous>, transform_indices = @transform_1, window_bounds = array<i64: 1, 128>}, {pipeline_mode = #tpu.pipeline_mode<synchronous>, transform_indices = @transform_2, window_bounds = array<i64: 1, 128>}, {pipeline_mode = #tpu.pipeline_mode<synchronous>, transform_indices = @transform_3, window_bounds = array<i64: 128, 128>}, {pipeline_mode = #tpu.pipeline_mode<synchronous>, transform_indices = @transform_4, window_bounds = array<i64: 1, 128>}, {transform_indices = @transform_5, window_bounds = array<i64: 256, 128>}]} {
    %c0 = arith.constant 0 : index
    %c0_0 = arith.constant 0 : index
    %0 = vector.load %arg1[%c0, %c0_0] : memref<256x128xf32, #tpu.memory_space<vmem>>, vector<256x128xf32>
    %cst = arith.constant dense<0.000000e+00> : vector<256xf32>
    %1 = vector.multi_reduction <add>, %0, %cst [1] : vector<256x128xf32> to vector<256xf32>
    %2 = vector.shape_cast %1 : vector<256xf32> to vector<256x1xf32>
    %cst_1 = arith.constant 1.280000e+02 : f32
    %3 = vector.broadcast %cst_1 : f32 to vector<256x1xf32>
    %4 = arith.divf %2, %3 : vector<256x1xf32>
    %5 = vector.broadcast %4 : vector<256x1xf32> to vector<256x128xf32>
    %6 = arith.subf %0, %5 : vector<256x128xf32>
    %7 = arith.mulf %6, %6 : vector<256x128xf32>
    %cst_2 = arith.constant dense<0.000000e+00> : vector<256xf32>
    %8 = vector.multi_reduction <add>, %7, %cst_2 [1] : vector<256x128xf32> to vector<256xf32>
    %9 = vector.shape_cast %8 : vector<256xf32> to vector<256x1xf32>
    %cst_3 = arith.constant 1.280000e+02 : f32
    %10 = vector.broadcast %cst_3 : f32 to vector<256x1xf32>
    %11 = arith.divf %9, %10 : vector<256x1xf32>
    %cst_4 = arith.constant 9.99999974E-6 : f32
    %12 = vector.broadcast %cst_4 : f32 to vector<256x1xf32>
    %13 = arith.addf %11, %12 : vector<256x1xf32>
    %14 = math.rsqrt %13 : vector<256x1xf32>
    %15 = vector.broadcast %14 : vector<256x1xf32> to vector<256x128xf32>
    %16 = arith.mulf %6, %15 : vector<256x128xf32>
    %c0_5 = arith.constant 0 : index
    %c0_6 = arith.constant 0 : index
    %17 = vector.load %arg2[%c0_5, %c0_6] : memref<1x128xf32, #tpu.memory_space<vmem>>, vector<1x128xf32>
    %18 = vector.broadcast %17 : vector<1x128xf32> to vector<256x128xf32>
    %19 = arith.mulf %16, %18 : vector<256x128xf32>
    %c0_7 = arith.constant 0 : index
    %c0_8 = arith.constant 0 : index
    %20 = vector.load %arg3[%c0_7, %c0_8] : memref<1x128xf32, #tpu.memory_space<vmem>>, vector<1x128xf32>
    %21 = vector.broadcast %20 : vector<1x128xf32> to vector<256x128xf32>
    %22 = arith.addf %19, %21 : vector<256x128xf32>
    %23 = arith.truncf %22 : vector<256x128xf32> to vector<256x128xbf16>
    %c0_9 = arith.constant 0 : index
    %c0_10 = arith.constant 0 : index
    %24 = vector.load %arg4[%c0_9, %c0_10] : memref<128x128xbf16, #tpu.memory_space<vmem>>, vector<128x128xbf16>
    %cst_11 = arith.constant dense<0.000000e+00> : vector<256x128xf32>
    %25 = tpu.matmul %23, %24, %cst_11 {dimension_numbers = #tpu.dot_dimension_numbers<[1], [0], [0], [1], [0, 0, 1, 1], [], []>} : vector<256x128xbf16>, vector<128x128xbf16>, vector<256x128xf32> -> vector<256x128xf32>
    %c0_12 = arith.constant 0 : index
    %c0_13 = arith.constant 0 : index
    %26 = vector.load %arg5[%c0_12, %c0_13] : memref<1x128xf32, #tpu.memory_space<vmem>>, vector<1x128xf32>
    %27 = vector.broadcast %26 : vector<1x128xf32> to vector<256x128xf32>
    %28 = arith.addf %25, %27 : vector<256x128xf32>
    %c0_14 = arith.constant 0 : index
    %c0_15 = arith.constant 0 : index
    %29 = vector.load %arg6[%c0_14, %c0_15] : memref<256x128xf32, #tpu.memory_space<vmem>>, vector<256x128xf32>
    tpu.vector_store %arg6[%c0_14, %c0_15], %28 {strides = array<i32>} : memref<256x128xf32, #tpu.memory_space<vmem>>, vector<256x128xf32>,
    return
  }
  func.func @transform_0(%arg0: i32) -> (i32, i32) {
    %c0_i32 = arith.constant 0 : i32
    %c0_i32_0 = arith.constant 0 : i32
    return %arg0, %c0_i32 : i32, i32
  }
  func.func @transform_1(%arg0: i32) -> (i32, i32) {
    %c0_i32 = arith.constant 0 : i32
    %c0_i32_0 = arith.constant 0 : i32
    %c0_i32_1 = arith.constant 0 : i32
    return %c0_i32, %c0_i32_0 : i32, i32
  }
  func.func @transform_2(%arg0: i32) -> (i32, i32) {
    %c0_i32 = arith.constant 0 : i32
    %c0_i32_0 = arith.constant 0 : i32
    %c0_i32_1 = arith.constant 0 : i32
    return %c0_i32, %c0_i32_0 : i32, i32
  }
  func.func @transform_3(%arg0: i32) -> (i32, i32) {
    %c0_i32 = arith.constant 0 : i32
    %c0_i32_0 = arith.constant 0 : i32
    %c0_i32_1 = arith.constant 0 : i32
    return %c0_i32, %c0_i32_0 : i32, i32
  }
  func.func @transform_4(%arg0: i32) -> (i32, i32) {
    %c0_i32 = arith.constant 0 : i32
    %c0_i32_0 = arith.constant 0 : i32
    %c0_i32_1 = arith.constant 0 : i32
    return %c0_i32, %c0_i32_0 : i32, i32
  }
  func.func @transform_5(%arg0: i32) -> (i32, i32) {
    %c0_i32 = arith.constant 0 : i32
    %c0_i32_0 = arith.constant 0 : i32
    return %arg0, %c0_i32 : i32, i32
  }
}

</mosaic_0001>

<llo_original>
// kernel: tpu_custom_call.1
$region0: #{tpu_custom_call.1}
  #allocation0 [shape = 'u32[]', space=smem, size = 0x4, offset = 0x4, fixed_abs, tag = 'smem constant byte address 0x4 - core index']
  #allocation1 [shape = 'u32[144,128]{1,0:T(1,128)}', space=vmem, size = 0x12000, scoped, tag = 'internal scratch']
  %s0 = inlined_call_operand.hbm [shape: f32[512,128], index: 0, kind: input, shape index: {}]
  %s1 = inlined_call_operand.vmem [shape: f32[1,128], index: 1, kind: input, shape index: {}]
  %s2 = inlined_call_operand.vmem [shape: f32[1,128], index: 2, kind: input, shape index: {}]
  %s3 = inlined_call_operand.hbm [shape: bf16[128,128], index: 3, kind: input, shape index: {}]
  %s4 = inlined_call_operand.vmem [shape: f32[1,128], index: 4, kind: input, shape index: {}]
  %s5 = inlined_call_operand.hbm [shape: f32[512,128], index: 5, kind: output, shape index: {}]
  %s6 = sld [smem:[#allocation0]]
  $region61: #{tpu_custom_call.1} parent=0
    _
  %s8 = ssub.s32 1, %s6
  %s9 = scalar_select 0, %s8, %s6
  $region1: #{tpu_custom_call.1} parent=0
    #allocation2 [shape = 'u8[262144]{0}', space=vmem, size = 0x40000, scoped, tag = 'input window, operand 0']
    #allocation3 [shape = 's32[2]{0}', space=sflag, size = 0x8, scoped, tag = 'scoped memory for tpu_custom_call.1']
    #allocation4 [shape = 's32[2]{0}', space=sflag, size = 0x8, scoped, tag = 'scoped memory for tpu_custom_call.1']
    #allocation5 [shape = 'u8[32768]{0}', space=vmem, size = 0x8000, scoped, tag = 'input window, operand 3, single buffered']
    #allocation6 [shape = 's32[1]{0}', space=sflag, size = 0x4, scoped, tag = 'scoped memory for tpu_custom_call.1']
    #allocation7 [shape = 'u8[262144]{0}', space=vmem, size = 0x40000, scoped, tag = 'output window, operand 0']
    %10 = vsyncpa [#allocation3], 0
    %s11 = scalar_lea.sflag [#allocation3], 1
    %12 = vsyncpa %s11, 0
    %13 = vsyncpa [#allocation6], 0
    %14 = vsyncpa [#allocation4], 0
    %s15 = scalar_lea.sflag [#allocation4], 1
    %16 = vsyncpa %s15, 0
    loop: start=0, step=1, limit=4
    $region2: #{tpu_custom_call.1} parent=1 // loop_pre_header
      _
    $region3: #{tpu_custom_call.1} parent=1 // loop_header
      %s18 = sphi 0, %s22
      %p19 = scmp.ge.s32.totalorder %s18, 4
      %s28 = sphi 0, %s30
      %s31 = sphi 0, %s28
      %s32 = sphi 0, %s31
      %s48 = sphi 0, %s32
      %s52 = sphi 0, %s52
      %s54 = sphi 0, %s52
      %s55 = sphi 0, %s54
      %s69 = sphi 0, %s55
      %s73 = sphi 0, %s73
      %s75 = sphi 0, %s73
      %s76 = sphi 0, %s75
      %s90 = sphi 0, %s76
      %s94 = sphi 0, %s94
      %s96 = sphi 0, %s94
      %s97 = sphi 0, %s96
      %s111 = sphi 0, %s97
      %s115 = sphi 0, %s115
      %s117 = sphi 0, %s115
      %s118 = sphi 0, %s117
      %s132 = sphi 0, %s118
      %s138 = sphi 0, %s140
      %s141 = sphi 0, %s138
      %s142 = sphi 0, %s141
      %s158 = sphi 0, %s142
    $region4: #{tpu_custom_call.1} parent=1 // loop_header_branch
      %21 = sbr.rel (%p19) target = $region8
    $region5: #{tpu_custom_call.1} parent=1 // loop_body
      %s23 = ssub.s32 %s18, 1
      %s24 = ssub.s32 %s18, 2
      %s25 = sadd.s32 %s18, 1
      %s26 = ssub.s32 %s18, %s25
      %p27 = scmp.eq.s32.totalorder %s26, 0
      %s29 = sadd.s32 %s28, 1
      %s30 = scalar_select %p27, %s28, %s29
      %p33 = pneg %p27
      %p34 = scmp.eq.s32.totalorder %s18, 1
      %p35 = por %p33, %p34
      %p36 = scmp.ne.s32.totalorder %s28, %s31
      %p37 = scmp.eq.s32.totalorder %s18, 0
      %p38 = por %p36, %p37
      %p39 = scmp.ne.s32.totalorder %s28, %s31
      %p40 = scmp.eq.s32.totalorder %s23, 1
      %p41 = por %p39, %p40
      %p42 = scmp.ne.s32.totalorder %s31, %s32
      %p43 = scmp.eq.s32.totalorder %s23, 0
      %p44 = por %p42, %p43
      %p45 = scmp.ne.s32.totalorder %s31, %s32
      %p46 = scmp.eq.s32.totalorder %s24, 1
      %p47 = por %p45, %p46
      %p49 = scmp.ne.s32.totalorder %s32, %s48
      %p50 = scmp.eq.s32.totalorder %s24, 0
      %p51 = por %p49, %p50
      %s53 = sadd.s32 %s52, 1
      %p56 = scmp.eq.s32.totalorder %s18, 1
      %p57 = scmp.ne.s32.totalorder %s52, %s54
      %p58 = scmp.eq.s32.totalorder %s18, 0
      %p59 = por %p57, %p58
      %p60 = scmp.ne.s32.totalorder %s52, %s54
      %p61 = scmp.eq.s32.totalorder %s23, 1
      %p62 = por %p60, %p61
      %p63 = scmp.ne.s32.totalorder %s54, %s55
      %p64 = scmp.eq.s32.totalorder %s23, 0
      %p65 = por %p63, %p64
      %p66 = scmp.ne.s32.totalorder %s54, %s55
      %p67 = scmp.eq.s32.totalorder %s24, 1
      %p68 = por %p66, %p67
      %p70 = scmp.ne.s32.totalorder %s55, %s69
      %p71 = scmp.eq.s32.totalorder %s24, 0
      %p72 = por %p70, %p71
      %s74 = sadd.s32 %s73, 1
      %p77 = scmp.eq.s32.totalorder %s18, 1
      %p78 = scmp.ne.s32.totalorder %s73, %s75
      %p79 = scmp.eq.s32.totalorder %s18, 0
      %p80 = por %p78, %p79
      %p81 = scmp.ne.s32.totalorder %s73, %s75
      %p82 = scmp.eq.s32.totalorder %s23, 1
      %p83 = por %p81, %p82
      %p84 = scmp.ne.s32.totalorder %s75, %s76
      %p85 = scmp.eq.s32.totalorder %s23, 0
      %p86 = por %p84, %p85
      %p87 = scmp.ne.s32.totalorder %s75, %s76
      %p88 = scmp.eq.s32.totalorder %s24, 1
      %p89 = por %p87, %p88
      %p91 = scmp.ne.s32.totalorder %s76, %s90
      %p92 = scmp.eq.s32.totalorder %s24, 0
      %p93 = por %p91, %p92
      %s95 = sadd.s32 %s94, 1
      %p98 = scmp.eq.s32.totalorder %s18, 1
      %p99 = scmp.ne.s32.totalorder %s94, %s96
      %p100 = scmp.eq.s32.totalorder %s18, 0
      %p101 = por %p99, %p100
      %p102 = scmp.ne.s32.totalorder %s94, %s96
      %p103 = scmp.eq.s32.totalorder %s23, 1
      %p104 = por %p102, %p103
      %p105 = scmp.ne.s32.totalorder %s96, %s97
      %p106 = scmp.eq.s32.totalorder %s23, 0
      %p107 = por %p105, %p106
      %p108 = scmp.ne.s32.totalorder %s96, %s97
      %p109 = scmp.eq.s32.totalorder %s24, 1
      %p110 = por %p108, %p109
      %p112 = scmp.ne.s32.totalorder %s97, %s111
      %p113 = scmp.eq.s32.totalorder %s24, 0
      %p114 = por %p112, %p113
      %s116 = sadd.s32 %s115, 1
      %p119 = scmp.eq.s32.totalorder %s18, 1
      %p120 = scmp.ne.s32.totalorder %s115, %s117
      %p121 = scmp.eq.s32.totalorder %s18, 0
      %p122 = por %p120, %p121
      %p123 = scmp.ne.s32.totalorder %s115, %s117
      %p124 = scmp.eq.s32.totalorder %s23, 1
      %p125 = por %p123, %p124
      %p126 = scmp.ne.s32.totalorder %s117, %s118
      %p127 = scmp.eq.s32.totalorder %s23, 0
      %p128 = por %p126, %p127
      %p129 = scmp.ne.s32.totalorder %s117, %s118
      %p130 = scmp.eq.s32.totalorder %s24, 1
      %p131 = por %p129, %p130
      %p133 = scmp.ne.s32.totalorder %s118, %s132
      %p134 = scmp.eq.s32.totalorder %s24, 0
      %p135 = por %p133, %p134
      %s136 = ssub.s32 %s18, %s25
      %p137 = scmp.eq.s32.totalorder %s136, 0
      %s139 = sadd.s32 %s138, 1
      %s140 = scalar_select %p137, %s138, %s139
      %p143 = pneg %p137
      %p144 = scmp.eq.s32.totalorder %s18, 1
      %p145 = por %p143, %p144
      %p146 = scmp.ne.s32.totalorder %s138, %s141
      %p147 = scmp.eq.s32.totalorder %s18, 0
      %p148 = por %p146, %p147
      %p149 = scmp.ne.s32.totalorder %s138, %s141
      %p150 = scmp.eq.s32.totalorder %s23, 1
      %p151 = por %p149, %p150
      %p152 = scmp.ne.s32.totalorder %s141, %s142
      %p153 = scmp.eq.s32.totalorder %s23, 0
      %p154 = por %p152, %p153
      %p155 = scmp.ne.s32.totalorder %s141, %s142
      %p156 = scmp.eq.s32.totalorder %s24, 1
      %p157 = por %p155, %p156
      %p159 = scmp.ne.s32.totalorder %s142, %s158
      %p160 = scmp.eq.s32.totalorder %s24, 0
      %p161 = por %p159, %p160
      %p162 = scmp.le.s32.totalorder 1, %s18
      %p163 = scmp.lt.s32.totalorder %s18, 3
      %p164 = pnand %p162, %p163
      %p165 = pneg %p164
      // Predicated region
      $region9: #{tpu_custom_call.1} parent=5 // pred_check
        _
      $region10: #{tpu_custom_call.1} parent=5 // pred_check_branch
        %167 = sbr.rel (%p164) target = $region12
      $region11: #{tpu_custom_call.1} parent=5 // pred_region
        %s168 = ssub.s32 %s18, 1
        // Predicated region
        $region13: #{tpu_custom_call.1} parent=11 // pred_check
          %p169 = pneg %p65
        $region14: #{tpu_custom_call.1} parent=11 // pred_check_branch
          %171 = sbr.rel (%p169) target = $region16
        $region15: #{tpu_custom_call.1} parent=11 // pred_region
          _
        $region16: #{tpu_custom_call.1} parent=11 // pred_fallthru
          _
        // Predicated region
        $region17: #{tpu_custom_call.1} parent=11 // pred_check
          %p172 = pneg %p86
        $region18: #{tpu_custom_call.1} parent=11 // pred_check_branch
          %174 = sbr.rel (%p172) target = $region20
        $region19: #{tpu_custom_call.1} parent=11 // pred_region
          _
        $region20: #{tpu_custom_call.1} parent=11 // pred_fallthru
          _
        // Predicated region
        $region21: #{tpu_custom_call.1} parent=11 // pred_check
          %p175 = pneg %p107
        $region22: #{tpu_custom_call.1} parent=11 // pred_check_branch
          %177 = sbr.rel (%p175) target = $region24
        $region23: #{tpu_custom_call.1} parent=11 // pred_region
          %s179 = ssub.s32 1024, 1024
          %180 = vsyncadd [#allocation6], %s179
          %s181 = sshll.u32 [#allocation5], 4
          %s182 = int_to_ptr.vmem [resolvable:$true] %s181
          %187 = dma.hbm_to_vmem [thread:$0]  %s3, 1024, %s182, [#allocation6], 64, 64, 4
        $region24: #{tpu_custom_call.1} parent=11 // pred_fallthru
          _
        // Predicated region
        $region25: #{tpu_custom_call.1} parent=11 // pred_check
          %p188 = pneg %p128
        $region26: #{tpu_custom_call.1} parent=11 // pred_check_branch
          %190 = sbr.rel (%p188) target = $region28
        $region27: #{tpu_custom_call.1} parent=11 // pred_region
          _
        $region28: #{tpu_custom_call.1} parent=11 // pred_fallthru
          _
      $region12: #{tpu_custom_call.1} parent=5 // pred_fallthru
        _
      %p191 = scmp.lt.s32.totalorder %s18, 2
      // Predicated region
      $region29: #{tpu_custom_call.1} parent=5 // pred_check
        %p192 = pneg %p191
      $region30: #{tpu_custom_call.1} parent=5 // pred_check_branch
        %194 = sbr.rel (%p192) target = $region32
      $region31: #{tpu_custom_call.1} parent=5 // pred_region
        // Predicated region
        $region33: #{tpu_custom_call.1} parent=31 // pred_check
          %p195 = pneg %p38
        $region34: #{tpu_custom_call.1} parent=31 // pred_check_branch
          %197 = sbr.rel (%p195) target = $region36
        $region35: #{tpu_custom_call.1} parent=31 // pred_region
          %s198 = sand.u32 %s28, 1
          %s199 = scalar_lea.sflag [#allocation3], %s198
          %s200 = sand.u32 %s28, 1
          %s201 = smul.addr %s200, 256
          %s202 = scalar_lea.vmem [#allocation2], %s201
          %s203 = smul.u32 32, %s18
          %s205 = ssub.s32 4096, 4096
          %206 = vsyncadd %s199, %s205
          %s207 = smul.addr %s203, 128
          %s208 = scalar_lea.hbm %s0, %s207
          %s209 = sshll.u32 %s202, 4
          %s210 = int_to_ptr.vmem [resolvable:$true] %s209
          %215 = dma.hbm_to_vmem [thread:$0]  %s208, 4096, %s210, %s199, 128, 128, 8
        $region36: #{tpu_custom_call.1} parent=31 // pred_fallthru
          _
      $region32: #{tpu_custom_call.1} parent=5 // pred_fallthru
        _
      %p216 = scmp.le.s32.totalorder 1, %s18
      %p217 = scmp.lt.s32.totalorder %s18, 3
      %p218 = pnand %p216, %p217
      %p219 = pneg %p218
      // Predicated region
      $region37: #{tpu_custom_call.1} parent=5 // pred_check
        _
      $region38: #{tpu_custom_call.1} parent=5 // pred_check_branch
        %221 = sbr.rel (%p218) target = $region40
      $region39: #{tpu_custom_call.1} parent=5 // pred_region
        %s222 = ssub.s32 %s18, 1
        %s223 = sand.u32 %s31, 1
        %s224 = scalar_lea.sflag [#allocation3], %s223
        %s225 = sand.u32 %s31, 1
        %s226 = smul.addr %s225, 256
        %s227 = scalar_lea.vmem [#allocation2], %s226
        // Predicated region
        $region41: #{tpu_custom_call.1} parent=39 // pred_check
          %p228 = pneg %p44
        $region42: #{tpu_custom_call.1} parent=39 // pred_check_branch
          %230 = sbr.rel (%p228) target = $region44
        $region43: #{tpu_custom_call.1} parent=39 // pred_region
          %231 = dma.done %s224, 4096
        $region44: #{tpu_custom_call.1} parent=39 // pred_fallthru
          _
        // Predicated region
        $region45: #{tpu_custom_call.1} parent=39 // pred_check
          %p232 = pneg %p107
        $region46: #{tpu_custom_call.1} parent=39 // pred_check_branch
          %234 = sbr.rel (%p232) target = $region48
        $region47: #{tpu_custom_call.1} parent=39 // pred_region
          %235 = dma.done [#allocation6], 1024
        $region48: #{tpu_custom_call.1} parent=39 // pred_fallthru
          _
        %s236 = sand.u32 %s31, 1
        %s237 = scalar_lea.sflag [#allocation3], %s236
        %s238 = sand.u32 %s31, 1
        %s239 = smul.addr %s238, 256
        %s240 = scalar_lea.vmem [#allocation2], %s239
        %p241 = pneg %p44
        %p242 = pneg %p41
        %p243 = pneg %p65
        %p244 = pneg %p62
        %p245 = pneg %p86
        %p246 = pneg %p83
        %p247 = pneg %p107
        %p248 = pneg %p104
        %p249 = pneg %p128
        %p250 = pneg %p125
        %p251 = pneg %p154
        %p252 = pneg %p151
        %s253 = sand.u32 %s141, 1
        %s254 = scalar_lea.sflag [#allocation4], %s253
        %s255 = sand.u32 %s141, 1
        %s256 = smul.addr %s255, 256
        %s257 = scalar_lea.vmem [#allocation7], %s256
        %s258 = smul.u32 32, %s23
        %s259 = smul.u32 32, %s23
        %v261 = vld [vmem:[%s227] sm:$0xff]
        %v262 = vld [vmem:[%s227 + $0x8] sm:$0xff]
        %v263 = vld [vmem:[%s227 + $0x10] sm:$0xff]
        %v264 = vld [vmem:[%s227 + $0x18] sm:$0xff]
        %v265 = vld [vmem:[%s227 + $0x20] sm:$0xff]
        %v266 = vld [vmem:[%s227 + $0x28] sm:$0xff]
        %v267 = vld [vmem:[%s227 + $0x30] sm:$0xff]
        %v268 = vld [vmem:[%s227 + $0x38] sm:$0xff]
        %v269 = vld [vmem:[%s227 + $0x40] sm:$0xff]
        %v270 = vld [vmem:[%s227 + $0x48] sm:$0xff]
        %v271 = vld [vmem:[%s227 + $0x50] sm:$0xff]
        %v272 = vld [vmem:[%s227 + $0x58] sm:$0xff]
        %v273 = vld [vmem:[%s227 + $0x60] sm:$0xff]
        %v274 = vld [vmem:[%s227 + $0x68] sm:$0xff]
        %v275 = vld [vmem:[%s227 + $0x70] sm:$0xff]
        %v276 = vld [vmem:[%s227 + $0x78] sm:$0xff]
        %v277 = vld [vmem:[%s227 + $0x80] sm:$0xff]
        %v278 = vld [vmem:[%s227 + $0x88] sm:$0xff]
        %v279 = vld [vmem:[%s227 + $0x90] sm:$0xff]
        %v280 = vld [vmem:[%s227 + $0x98] sm:$0xff]
        %v281 = vld [vmem:[%s227 + $0xa0] sm:$0xff]
        %v282 = vld [vmem:[%s227 + $0xa8] sm:$0xff]
        %v283 = vld [vmem:[%s227 + $0xb0] sm:$0xff]
        %v284 = vld [vmem:[%s227 + $0xb8] sm:$0xff]
        %v285 = vld [vmem:[%s227 + $0xc0] sm:$0xff]
        %v286 = vld [vmem:[%s227 + $0xc8] sm:$0xff]
        %v287 = vld [vmem:[%s227 + $0xd0] sm:$0xff]
        %v288 = vld [vmem:[%s227 + $0xd8] sm:$0xff]
        %v289 = vld [vmem:[%s227 + $0xe0] sm:$0xff]
        %v290 = vld [vmem:[%s227 + $0xe8] sm:$0xff]
        %v291 = vld [vmem:[%s227 + $0xf0] sm:$0xff]
        %v292 = vld [vmem:[%s227 + $0xf8] sm:$0xff]
        %293 = vadd.xlane.f32.xlu0 %v261
        %v294 = vpop.xlane.xlu0 %293
        %295 = vadd.xlane.f32.xlu0 %v262
        %v296 = vpop.xlane.xlu0 %295
        %297 = vadd.xlane.f32.xlu0 %v263
        %v298 = vpop.xlane.xlu0 %297
        %299 = vadd.xlane.f32.xlu0 %v264
        %v300 = vpop.xlane.xlu0 %299
        %301 = vadd.xlane.f32.xlu0 %v265
        %v302 = vpop.xlane.xlu0 %301
        %303 = vadd.xlane.f32.xlu0 %v266
        %v304 = vpop.xlane.xlu0 %303
        %305 = vadd.xlane.f32.xlu0 %v267
        %v306 = vpop.xlane.xlu0 %305
        %307 = vadd.xlane.f32.xlu0 %v268
        %v308 = vpop.xlane.xlu0 %307
        %309 = vadd.xlane.f32.xlu0 %v269
        %v310 = vpop.xlane.xlu0 %309
        %311 = vadd.xlane.f32.xlu0 %v270
        %v312 = vpop.xlane.xlu0 %311
        %313 = vadd.xlane.f32.xlu0 %v271
        %v314 = vpop.xlane.xlu0 %313
        %315 = vadd.xlane.f32.xlu0 %v272
        %v316 = vpop.xlane.xlu0 %315
        %317 = vadd.xlane.f32.xlu0 %v273
        %v318 = vpop.xlane.xlu0 %317
        %319 = vadd.xlane.f32.xlu0 %v274
        %v320 = vpop.xlane.xlu0 %319
        %321 = vadd.xlane.f32.xlu0 %v275
        %v322 = vpop.xlane.xlu0 %321
        %323 = vadd.xlane.f32.xlu0 %v276
        %v324 = vpop.xlane.xlu0 %323
        %325 = vadd.xlane.f32.xlu0 %v277
        %v326 = vpop.xlane.xlu0 %325
        %327 = vadd.xlane.f32.xlu0 %v278
        %v328 = vpop.xlane.xlu0 %327
        %329 = vadd.xlane.f32.xlu0 %v279
        %v330 = vpop.xlane.xlu0 %329
        %331 = vadd.xlane.f32.xlu0 %v280
        %v332 = vpop.xlane.xlu0 %331
        %333 = vadd.xlane.f32.xlu0 %v281
        %v334 = vpop.xlane.xlu0 %333
        %335 = vadd.xlane.f32.xlu0 %v282
        %v336 = vpop.xlane.xlu0 %335
        %337 = vadd.xlane.f32.xlu0 %v283
        %v338 = vpop.xlane.xlu0 %337
        %339 = vadd.xlane.f32.xlu0 %v284
        %v340 = vpop.xlane.xlu0 %339
        %341 = vadd.xlane.f32.xlu0 %v285
        %v342 = vpop.xlane.xlu0 %341
        %343 = vadd.xlane.f32.xlu0 %v286
        %v344 = vpop.xlane.xlu0 %343
        %345 = vadd.xlane.f32.xlu0 %v287
        %v346 = vpop.xlane.xlu0 %345
        %347 = vadd.xlane.f32.xlu0 %v288
        %v348 = vpop.xlane.xlu0 %347
        %349 = vadd.xlane.f32.xlu0 %v289
        %v350 = vpop.xlane.xlu0 %349
        %351 = vadd.xlane.f32.xlu0 %v290
        %v352 = vpop.xlane.xlu0 %351
        %353 = vadd.xlane.f32.xlu0 %v291
        %v354 = vpop.xlane.xlu0 %353
        %355 = vadd.xlane.f32.xlu0 %v292
        %v356 = vpop.xlane.xlu0 %355
        %v357 = vrcp.pop 128.0
        %v358 = vmul.f32 %v294, %v357
        %v359 = vmul.f32 %v296, %v357
        %v360 = vmul.f32 %v298, %v357
        %v361 = vmul.f32 %v300, %v357
        %v362 = vmul.f32 %v302, %v357
        %v363 = vmul.f32 %v304, %v357
        %v364 = vmul.f32 %v306, %v357
        %v365 = vmul.f32 %v308, %v357
        %v366 = vmul.f32 %v310, %v357
        %v367 = vmul.f32 %v312, %v357
        %v368 = vmul.f32 %v314, %v357
        %v369 = vmul.f32 %v316, %v357
        %v370 = vmul.f32 %v318, %v357
        %v371 = vmul.f32 %v320, %v357
        %v372 = vmul.f32 %v322, %v357
        %v373 = vmul.f32 %v324, %v357
        %v374 = vmul.f32 %v326, %v357
        %v375 = vmul.f32 %v328, %v357
        %v376 = vmul.f32 %v330, %v357
        %v377 = vmul.f32 %v332, %v357
        %v378 = vmul.f32 %v334, %v357
        %v379 = vmul.f32 %v336, %v357
        %v380 = vmul.f32 %v338, %v357
        %v381 = vmul.f32 %v340, %v357
        %v382 = vmul.f32 %v342, %v357
        %v383 = vmul.f32 %v344, %v357
        %v384 = vmul.f32 %v346, %v357
        %v385 = vmul.f32 %v348, %v357
        %v386 = vmul.f32 %v350, %v357
        %v387 = vmul.f32 %v352, %v357
        %v388 = vmul.f32 %v354, %v357
        %v389 = vmul.f32 %v356, %v357
        %v390 = vsub.f32 %v261, %v358
        %v391 = vsub.f32 %v262, %v359
        %v392 = vsub.f32 %v263, %v360
        %v393 = vsub.f32 %v264, %v361
        %v394 = vsub.f32 %v265, %v362
        %v395 = vsub.f32 %v266, %v363
        %v396 = vsub.f32 %v267, %v364
        %v397 = vsub.f32 %v268, %v365
        %v398 = vsub.f32 %v269, %v366
        %v399 = vsub.f32 %v270, %v367
        %v400 = vsub.f32 %v271, %v368
        %v401 = vsub.f32 %v272, %v369
        %v402 = vsub.f32 %v273, %v370
        %v403 = vsub.f32 %v274, %v371
        %v404 = vsub.f32 %v275, %v372
        %v405 = vsub.f32 %v276, %v373
        %v406 = vsub.f32 %v277, %v374
        %v407 = vsub.f32 %v278, %v375
        %v408 = vsub.f32 %v279, %v376
        %v409 = vsub.f32 %v280, %v377
        %v410 = vsub.f32 %v281, %v378
        %v411 = vsub.f32 %v282, %v379
        %v412 = vsub.f32 %v283, %v380
        %v413 = vsub.f32 %v284, %v381
        %v414 = vsub.f32 %v285, %v382
        %v415 = vsub.f32 %v286, %v383
        %v416 = vsub.f32 %v287, %v384
        %v417 = vsub.f32 %v288, %v385
        %v418 = vsub.f32 %v289, %v386
        %v419 = vsub.f32 %v290, %v387
        %v420 = vsub.f32 %v291, %v388
        %v421 = vsub.f32 %v292, %v389
        %v422 = vmul.f32 %v390, %v390
        %v423 = vmul.f32 %v391, %v391
        %v424 = vmul.f32 %v392, %v392
        %v425 = vmul.f32 %v393, %v393
        %v426 = vmul.f32 %v394, %v394
        %v427 = vmul.f32 %v395, %v395
        %v428 = vmul.f32 %v396, %v396
        %v429 = vmul.f32 %v397, %v397
        %v430 = vmul.f32 %v398, %v398
        %v431 = vmul.f32 %v399, %v399
        %v432 = vmul.f32 %v400, %v400
        %v433 = vmul.f32 %v401, %v401
        %v434 = vmul.f32 %v402, %v402
        %v435 = vmul.f32 %v403, %v403
        %v436 = vmul.f32 %v404, %v404
        %v437 = vmul.f32 %v405, %v405
        %v438 = vmul.f32 %v406, %v406
        %v439 = vmul.f32 %v407, %v407
        %v440 = vmul.f32 %v408, %v408
        %v441 = vmul.f32 %v409, %v409
        %v442 = vmul.f32 %v410, %v410
        %v443 = vmul.f32 %v411, %v411
        %v444 = vmul.f32 %v412, %v412
        %v445 = vmul.f32 %v413, %v413
        %v446 = vmul.f32 %v414, %v414
        %v447 = vmul.f32 %v415, %v415
        %v448 = vmul.f32 %v416, %v416
        %v449 = vmul.f32 %v417, %v417
        %v450 = vmul.f32 %v418, %v418
        %v451 = vmul.f32 %v419, %v419
        %v452 = vmul.f32 %v420, %v420
        %v453 = vmul.f32 %v421, %v421
        %454 = vadd.xlane.f32.xlu0 %v422
        %v455 = vpop.xlane.xlu0 %454
        %456 = vadd.xlane.f32.xlu0 %v423
        %v457 = vpop.xlane.xlu0 %456
        %458 = vadd.xlane.f32.xlu0 %v424
        %v459 = vpop.xlane.xlu0 %458
        %460 = vadd.xlane.f32.xlu0 %v425
        %v461 = vpop.xlane.xlu0 %460
        %462 = vadd.xlane.f32.xlu0 %v426
        %v463 = vpop.xlane.xlu0 %462
        %464 = vadd.xlane.f32.xlu0 %v427
        %v465 = vpop.xlane.xlu0 %464
        %466 = vadd.xlane.f32.xlu0 %v428
        %v467 = vpop.xlane.xlu0 %466
        %468 = vadd.xlane.f32.xlu0 %v429
        %v469 = vpop.xlane.xlu0 %468
        %470 = vadd.xlane.f32.xlu0 %v430
        %v471 = vpop.xlane.xlu0 %470
        %472 = vadd.xlane.f32.xlu0 %v431
        %v473 = vpop.xlane.xlu0 %472
        %474 = vadd.xlane.f32.xlu0 %v432
        %v475 = vpop.xlane.xlu0 %474
        %476 = vadd.xlane.f32.xlu0 %v433
        %v477 = vpop.xlane.xlu0 %476
        %478 = vadd.xlane.f32.xlu0 %v434
        %v479 = vpop.xlane.xlu0 %478
        %480 = vadd.xlane.f32.xlu0 %v435
        %v481 = vpop.xlane.xlu0 %480
        %482 = vadd.xlane.f32.xlu0 %v436
        %v483 = vpop.xlane.xlu0 %482
        %484 = vadd.xlane.f32.xlu0 %v437
        %v485 = vpop.xlane.xlu0 %484
        %486 = vadd.xlane.f32.xlu0 %v438
        %v487 = vpop.xlane.xlu0 %486
        %488 = vadd.xlane.f32.xlu0 %v439
        %v489 = vpop.xlane.xlu0 %488
        %490 = vadd.xlane.f32.xlu0 %v440
        %v491 = vpop.xlane.xlu0 %490
        %492 = vadd.xlane.f32.xlu0 %v441
        %v493 = vpop.xlane.xlu0 %492
        %494 = vadd.xlane.f32.xlu0 %v442
        %v495 = vpop.xlane.xlu0 %494
        %496 = vadd.xlane.f32.xlu0 %v443
        %v497 = vpop.xlane.xlu0 %496
        %498 = vadd.xlane.f32.xlu0 %v444
        %v499 = vpop.xlane.xlu0 %498
        %500 = vadd.xlane.f32.xlu0 %v445
        %v501 = vpop.xlane.xlu0 %500
        %502 = vadd.xlane.f32.xlu0 %v446
        %v503 = vpop.xlane.xlu0 %502
        %504 = vadd.xlane.f32.xlu0 %v447
        %v505 = vpop.xlane.xlu0 %504
        %506 = vadd.xlane.f32.xlu0 %v448
        %v507 = vpop.xlane.xlu0 %506
        %508 = vadd.xlane.f32.xlu0 %v449
        %v509 = vpop.xlane.xlu0 %508
        %510 = vadd.xlane.f32.xlu0 %v450
        %v511 = vpop.xlane.xlu0 %510
        %512 = vadd.xlane.f32.xlu0 %v451
        %v513 = vpop.xlane.xlu0 %512
        %514 = vadd.xlane.f32.xlu0 %v452
        %v515 = vpop.xlane.xlu0 %514
        %516 = vadd.xlane.f32.xlu0 %v453
        %v517 = vpop.xlane.xlu0 %516
        %v518 = vmul.f32 %v455, %v357
        %v519 = vmul.f32 %v457, %v357
        %v520 = vmul.f32 %v459, %v357
        %v521 = vmul.f32 %v461, %v357
        %v522 = vmul.f32 %v463, %v357
        %v523 = vmul.f32 %v465, %v357
        %v524 = vmul.f32 %v467, %v357
        %v525 = vmul.f32 %v469, %v357
        %v526 = vmul.f32 %v471, %v357
        %v527 = vmul.f32 %v473, %v357
        %v528 = vmul.f32 %v475, %v357
        %v529 = vmul.f32 %v477, %v357
        %v530 = vmul.f32 %v479, %v357
        %v531 = vmul.f32 %v481, %v357
        %v532 = vmul.f32 %v483, %v357
        %v533 = vmul.f32 %v485, %v357
        %v534 = vmul.f32 %v487, %v357
        %v535 = vmul.f32 %v489, %v357
        %v536 = vmul.f32 %v491, %v357
        %v537 = vmul.f32 %v493, %v357
        %v538 = vmul.f32 %v495, %v357
        %v539 = vmul.f32 %v497, %v357
        %v540 = vmul.f32 %v499, %v357
        %v541 = vmul.f32 %v501, %v357
        %v542 = vmul.f32 %v503, %v357
        %v543 = vmul.f32 %v505, %v357
        %v544 = vmul.f32 %v507, %v357
        %v545 = vmul.f32 %v509, %v357
        %v546 = vmul.f32 %v511, %v357
        %v547 = vmul.f32 %v513, %v357
        %v548 = vmul.f32 %v515, %v357
        %v549 = vmul.f32 %v517, %v357
        %v550 = vadd.f32 %v518, 1e-05
        %v551 = vadd.f32 %v519, 1e-05
        %v552 = vadd.f32 %v520, 1e-05
        %v553 = vadd.f32 %v521, 1e-05
        %v554 = vadd.f32 %v522, 1e-05
        %v555 = vadd.f32 %v523, 1e-05
        %v556 = vadd.f32 %v524, 1e-05
        %v557 = vadd.f32 %v525, 1e-05
        %v558 = vadd.f32 %v526, 1e-05
        %v559 = vadd.f32 %v527, 1e-05
        %v560 = vadd.f32 %v528, 1e-05
        %v561 = vadd.f32 %v529, 1e-05
        %v562 = vadd.f32 %v530, 1e-05
        %v563 = vadd.f32 %v531, 1e-05
        %v564 = vadd.f32 %v532, 1e-05
        %v565 = vadd.f32 %v533, 1e-05
        %v566 = vadd.f32 %v534, 1e-05
        %v567 = vadd.f32 %v535, 1e-05
        %v568 = vadd.f32 %v536, 1e-05
        %v569 = vadd.f32 %v537, 1e-05
        %v570 = vadd.f32 %v538, 1e-05
        %v571 = vadd.f32 %v539, 1e-05
        %v572 = vadd.f32 %v540, 1e-05
        %v573 = vadd.f32 %v541, 1e-05
        %v574 = vadd.f32 %v542, 1e-05
        %v575 = vadd.f32 %v543, 1e-05
        %v576 = vadd.f32 %v544, 1e-05
        %v577 = vadd.f32 %v545, 1e-05
        %v578 = vadd.f32 %v546, 1e-05
        %v579 = vadd.f32 %v547, 1e-05
        %v580 = vadd.f32 %v548, 1e-05
        %v581 = vadd.f32 %v549, 1e-05
        %v582 = vrsqrt.pop %v550
        %v583 = vrsqrt.pop %v551
        %v584 = vrsqrt.pop %v552
        %v585 = vrsqrt.pop %v553
        %v586 = vrsqrt.pop %v554
        %v587 = vrsqrt.pop %v555
        %v588 = vrsqrt.pop %v556
        %v589 = vrsqrt.pop %v557
        %v590 = vrsqrt.pop %v558
        %v591 = vrsqrt.pop %v559
        %v592 = vrsqrt.pop %v560
        %v593 = vrsqrt.pop %v561
        %v594 = vrsqrt.pop %v562
        %v595 = vrsqrt.pop %v563
        %v596 = vrsqrt.pop %v564
        %v597 = vrsqrt.pop %v565
        %v598 = vrsqrt.pop %v566
        %v599 = vrsqrt.pop %v567
        %v600 = vrsqrt.pop %v568
        %v601 = vrsqrt.pop %v569
        %v602 = vrsqrt.pop %v570
        %v603 = vrsqrt.pop %v571
        %v604 = vrsqrt.pop %v572
        %v605 = vrsqrt.pop %v573
        %v606 = vrsqrt.pop %v574
        %v607 = vrsqrt.pop %v575
        %v608 = vrsqrt.pop %v576
        %v609 = vrsqrt.pop %v577
        %v610 = vrsqrt.pop %v578
        %v611 = vrsqrt.pop %v579
        %v612 = vrsqrt.pop %v580
        %v613 = vrsqrt.pop %v581
        %v614 = vmul.f32 %v390, %v582
        %v615 = vmul.f32 %v391, %v583
        %v616 = vmul.f32 %v392, %v584
        %v617 = vmul.f32 %v393, %v585
        %v618 = vmul.f32 %v394, %v586
        %v619 = vmul.f32 %v395, %v587
        %v620 = vmul.f32 %v396, %v588
        %v621 = vmul.f32 %v397, %v589
        %v622 = vmul.f32 %v398, %v590
        %v623 = vmul.f32 %v399, %v591
        %v624 = vmul.f32 %v400, %v592
        %v625 = vmul.f32 %v401, %v593
        %v626 = vmul.f32 %v402, %v594
        %v627 = vmul.f32 %v403, %v595
        %v628 = vmul.f32 %v404, %v596
        %v629 = vmul.f32 %v405, %v597
        %v630 = vmul.f32 %v406, %v598
        %v631 = vmul.f32 %v407, %v599
        %v632 = vmul.f32 %v408, %v600
        %v633 = vmul.f32 %v409, %v601
        %v634 = vmul.f32 %v410, %v602
        %v635 = vmul.f32 %v411, %v603
        %v636 = vmul.f32 %v412, %v604
        %v637 = vmul.f32 %v413, %v605
        %v638 = vmul.f32 %v414, %v606
        %v639 = vmul.f32 %v415, %v607
        %v640 = vmul.f32 %v416, %v608
        %v641 = vmul.f32 %v417, %v609
        %v642 = vmul.f32 %v418, %v610
        %v643 = vmul.f32 %v419, %v611
        %v644 = vmul.f32 %v420, %v612
        %v645 = vmul.f32 %v421, %v613
        %v646 = vld [vmem:[%s1] sm:$0x1]
        %v648 = vlaneseq
        %v649 = vshrl.u32 %v648, 7
        %v650 = vsub.s32 0, %v649
        %v651 = vrot.slane %v646, %v650
        %v653 = vmul.f32 %v614, %v651
        %v654 = vmul.f32 %v615, %v651
        %v655 = vmul.f32 %v616, %v651
        %v656 = vmul.f32 %v617, %v651
        %v657 = vmul.f32 %v618, %v651
        %v658 = vmul.f32 %v619, %v651
        %v659 = vmul.f32 %v620, %v651
        %v660 = vmul.f32 %v621, %v651
        %v661 = vmul.f32 %v622, %v651
        %v662 = vmul.f32 %v623, %v651
        %v663 = vmul.f32 %v624, %v651
        %v664 = vmul.f32 %v625, %v651
        %v665 = vmul.f32 %v626, %v651
        %v666 = vmul.f32 %v627, %v651
        %v667 = vmul.f32 %v628, %v651
        %v668 = vmul.f32 %v629, %v651
        %v669 = vmul.f32 %v630, %v651
        %v670 = vmul.f32 %v631, %v651
        %v671 = vmul.f32 %v632, %v651
        %v672 = vmul.f32 %v633, %v651
        %v673 = vmul.f32 %v634, %v651
        %v674 = vmul.f32 %v635, %v651
        %v675 = vmul.f32 %v636, %v651
        %v676 = vmul.f32 %v637, %v651
        %v677 = vmul.f32 %v638, %v651
        %v678 = vmul.f32 %v639, %v651
        %v679 = vmul.f32 %v640, %v651
        %v680 = vmul.f32 %v641, %v651
        %v681 = vmul.f32 %v642, %v651
        %v682 = vmul.f32 %v643, %v651
        %v683 = vmul.f32 %v644, %v651
        %v684 = vmul.f32 %v645, %v651
        %v685 = vld [vmem:[%s2] sm:$0x1]
        %v687 = vlaneseq
        %v688 = vshrl.u32 %v687, 7
        %v689 = vsub.s32 0, %v688
        %v690 = vrot.slane %v685, %v689
        %v692 = vadd.f32 %v653, %v690
        %v693 = vadd.f32 %v654, %v690
        %v694 = vadd.f32 %v655, %v690
        %v695 = vadd.f32 %v656, %v690
        %v696 = vadd.f32 %v657, %v690
        %v697 = vadd.f32 %v658, %v690
        %v698 = vadd.f32 %v659, %v690
        %v699 = vadd.f32 %v660, %v690
        %v700 = vadd.f32 %v661, %v690
        %v701 = vadd.f32 %v662, %v690
        %v702 = vadd.f32 %v663, %v690
        %v703 = vadd.f32 %v664, %v690
        %v704 = vadd.f32 %v665, %v690
        %v705 = vadd.f32 %v666, %v690
        %v706 = vadd.f32 %v667, %v690
        %v707 = vadd.f32 %v668, %v690
        %v708 = vadd.f32 %v669, %v690
        %v709 = vadd.f32 %v670, %v690
        %v710 = vadd.f32 %v671, %v690
        %v711 = vadd.f32 %v672, %v690
        %v712 = vadd.f32 %v673, %v690
        %v713 = vadd.f32 %v674, %v690
        %v714 = vadd.f32 %v675, %v690
        %v715 = vadd.f32 %v676, %v690
        %v716 = vadd.f32 %v677, %v690
        %v717 = vadd.f32 %v678, %v690
        %v718 = vadd.f32 %v679, %v690
        %v719 = vadd.f32 %v680, %v690
        %v720 = vadd.f32 %v681, %v690
        %v721 = vadd.f32 %v682, %v690
        %v722 = vadd.f32 %v683, %v690
        %v723 = vadd.f32 %v684, %v690
        %v724 = vpack.c.bf16 %v693, %v692
        %v725 = vpack.c.bf16 %v695, %v694
        %v726 = vpack.c.bf16 %v697, %v696
        %v727 = vpack.c.bf16 %v699, %v698
        %v728 = vpack.c.bf16 %v701, %v700
        %v729 = vpack.c.bf16 %v703, %v702
        %v730 = vpack.c.bf16 %v705, %v704
        %v731 = vpack.c.bf16 %v707, %v706
        %v732 = vpack.c.bf16 %v709, %v708
        %v733 = vpack.c.bf16 %v711, %v710
        %v734 = vpack.c.bf16 %v713, %v712
        %v735 = vpack.c.bf16 %v715, %v714
        %v736 = vpack.c.bf16 %v717, %v716
        %v737 = vpack.c.bf16 %v719, %v718
        %v738 = vpack.c.bf16 %v721, %v720
        %v739 = vpack.c.bf16 %v723, %v722
        %v740 = vld [vmem:[#allocation5] sm:$0xf]
        %v741 = vld [vmem:[#allocation5 + $0x4] sm:$0xf]
        %v742 = vld [vmem:[#allocation5 + $0x8] sm:$0xf]
        %v743 = vld [vmem:[#allocation5 + $0xc] sm:$0xf]
        %v744 = vld [vmem:[#allocation5 + $0x10] sm:$0xf]
        %v745 = vld [vmem:[#allocation5 + $0x14] sm:$0xf]
        %v746 = vld [vmem:[#allocation5 + $0x18] sm:$0xf]
        %v747 = vld [vmem:[#allocation5 + $0x1c] sm:$0xf]
        %v748 = vld [vmem:[#allocation5 + $0x20] sm:$0xf]
        %v749 = vld [vmem:[#allocation5 + $0x24] sm:$0xf]
        %v750 = vld [vmem:[#allocation5 + $0x28] sm:$0xf]
        %v751 = vld [vmem:[#allocation5 + $0x2c] sm:$0xf]
        %v752 = vld [vmem:[#allocation5 + $0x30] sm:$0xf]
        %v753 = vld [vmem:[#allocation5 + $0x34] sm:$0xf]
        %v754 = vld [vmem:[#allocation5 + $0x38] sm:$0xf]
        %v755 = vld [vmem:[#allocation5 + $0x3c] sm:$0xf]
        %v756 = vld [vmem:[%s4] sm:$0x1]
        %v758 = vlaneseq
        %v759 = vshrl.u32 %v758, 7
        %v760 = vsub.s32 0, %v759
        %v761 = vrot.slane %v756, %v760
        %v779 = vunpack.c.l.b16 %v740
        %v780 = vunpack.c.l.b16 %v741
        %v781 = vunpack.c.l.b16 %v742
        %v782 = vunpack.c.l.b16 %v743
        %v783 = vunpack.c.l.b16 %v744
        %v784 = vunpack.c.l.b16 %v745
        %v785 = vunpack.c.l.b16 %v746
        %v786 = vunpack.c.l.b16 %v747
        %v787 = vunpack.c.l.b16 %v748
        %v788 = vunpack.c.l.b16 %v749
        %v789 = vunpack.c.l.b16 %v750
        %v790 = vunpack.c.l.b16 %v751
        %v791 = vunpack.c.l.b16 %v752
        %v792 = vunpack.c.l.b16 %v753
        %v793 = vunpack.c.l.b16 %v754
        %v794 = vunpack.c.l.b16 %v755
        %v795 = vpack.c.b16 %v780, %v779
        %v796 = vpack.c.b16 %v782, %v781
        %v797 = vpack.c.b16 %v784, %v783
        %v798 = vpack.c.b16 %v786, %v785
        %v799 = vpack.c.b16 %v788, %v787
        %v800 = vpack.c.b16 %v790, %v789
        %v801 = vpack.c.b16 %v792, %v791
        %v802 = vpack.c.b16 %v794, %v793
        %811 = vmatprep.subr.bf16.mxu0 0
        %812 = vmatpush1.bf16.msra.mxu0 %v802
        %813 = vmatprep.subr.bf16.mxu0 0
        %814 = vmatpush1.bf16.msra.mxu0 %v801
        %815 = vmatprep.subr.bf16.mxu0 0
        %816 = vmatpush1.bf16.msra.mxu0 %v800
        %817 = vmatprep.subr.bf16.mxu0 0
        %818 = vmatpush1.bf16.msra.mxu0 %v799
        %819 = vmatprep.subr.bf16.mxu0 0
        %820 = vmatpush1.bf16.msra.mxu0 %v798
        %821 = vmatprep.subr.bf16.mxu0 0
        %822 = vmatpush1.bf16.msra.mxu0 %v797
        %823 = vmatprep.subr.bf16.mxu0 0
        %824 = vmatpush1.bf16.msra.mxu0 %v796
        %825 = vmatprep.subr.bf16.mxu0 0
        %826 = vmatpush1.bf16.msra.mxu0 %v795
        %827 = vmatprep.subr.bf16.mxu0 0
        %828 = vmatpush2.bf16.msra.mxu0 0
        %829 = vmatprep.subr.bf16.mxu0 0
        %830 = vmatpush2.bf16.msra.mxu0 0
        %831 = vmatprep.subr.bf16.mxu0 0
        %832 = vmatpush2.bf16.msra.mxu0 0
        %833 = vmatprep.subr.bf16.mxu0 0
        %834 = vmatpush2.bf16.msra.mxu0 0
        %835 = vmatprep.subr.bf16.mxu0 0
        %836 = vmatpush2.bf16.msra.mxu0 0
        %837 = vmatprep.subr.bf16.mxu0 0
        %838 = vmatpush2.bf16.msra.mxu0 0
        %839 = vmatprep.subr.bf16.mxu0 0
        %840 = vmatpush2.bf16.msra.mxu0 0
        %841 = vmatprep.subr.bf16.mxu0 0
        %842 = vmatpush2.bf16.msra.mxu0 0
        %843 = vmatprep.mubr.bf16.mxu0 0
        %844 = vmatmul.mubr.bf16.gmra.mxu0 %v724
        %v845 = vpop.f32.mrf.mxu0
        %v846 = vadd.f32 %v761, %v845
        %v847 = vpop.f32.mrf.mxu0
        %v848 = vpop.f32.mrf.mxu0
        %v849 = vadd.f32 %v761, %v848
        %v850 = vpop.f32.mrf.mxu0
        %851 = vmatprep.mubr.bf16.mxu0 0
        %852 = vmatmul.mubr.bf16.gmra.mxu0 %v725
        %v853 = vpop.f32.mrf.mxu0
        %v854 = vadd.f32 %v761, %v853
        %v855 = vpop.f32.mrf.mxu0
        %v856 = vpop.f32.mrf.mxu0
        %v857 = vadd.f32 %v761, %v856
        %v858 = vpop.f32.mrf.mxu0
        %859 = vmatprep.mubr.bf16.mxu0 0
        %860 = vmatmul.mubr.bf16.gmra.mxu0 %v726
        %v861 = vpop.f32.mrf.mxu0
        %v862 = vadd.f32 %v761, %v861
        %v863 = vpop.f32.mrf.mxu0
        %v864 = vpop.f32.mrf.mxu0
        %v865 = vadd.f32 %v761, %v864
        %v866 = vpop.f32.mrf.mxu0
        %867 = vmatprep.mubr.bf16.mxu0 0
        %868 = vmatmul.mubr.bf16.gmra.mxu0 %v727
        %v869 = vpop.f32.mrf.mxu0
        %v870 = vadd.f32 %v761, %v869
        %v871 = vpop.f32.mrf.mxu0
        %v872 = vpop.f32.mrf.mxu0
        %v873 = vadd.f32 %v761, %v872
        %v874 = vpop.f32.mrf.mxu0
        %875 = vmatprep.mubr.bf16.mxu0 0
        %876 = vmatmul.mubr.bf16.gmra.mxu0 %v728
        %v877 = vpop.f32.mrf.mxu0
        %v878 = vadd.f32 %v761, %v877
        %v879 = vpop.f32.mrf.mxu0
        %v880 = vpop.f32.mrf.mxu0
        %v881 = vadd.f32 %v761, %v880
        %v882 = vpop.f32.mrf.mxu0
        %883 = vmatprep.mubr.bf16.mxu0 0
        %884 = vmatmul.mubr.bf16.gmra.mxu0 %v729
        %v885 = vpop.f32.mrf.mxu0
        %v886 = vadd.f32 %v761, %v885
        %v887 = vpop.f32.mrf.mxu0
        %v888 = vpop.f32.mrf.mxu0
        %v889 = vadd.f32 %v761, %v888
        %v890 = vpop.f32.mrf.mxu0
        %891 = vmatprep.mubr.bf16.mxu0 0
        %892 = vmatmul.mubr.bf16.gmra.mxu0 %v730
        %v893 = vpop.f32.mrf.mxu0
        %v894 = vadd.f32 %v761, %v893
        %v895 = vpop.f32.mrf.mxu0
        %v896 = vpop.f32.mrf.mxu0
        %v897 = vadd.f32 %v761, %v896
        %v898 = vpop.f32.mrf.mxu0
        %899 = vmatprep.mubr.bf16.mxu0 0
        %900 = vmatmul.mubr.bf16.gmra.mxu0 %v731
        %v901 = vpop.f32.mrf.mxu0
        %v902 = vadd.f32 %v761, %v901
        %v903 = vpop.f32.mrf.mxu0
        %v904 = vpop.f32.mrf.mxu0
        %v905 = vadd.f32 %v761, %v904
        %v906 = vpop.f32.mrf.mxu0
        %907 = vmatprep.mubr.bf16.mxu0 0
        %908 = vmatmul.mubr.bf16.gmra.mxu0 %v732
        %v909 = vpop.f32.mrf.mxu0
        %v910 = vadd.f32 %v761, %v909
        %v911 = vpop.f32.mrf.mxu0
        %v912 = vpop.f32.mrf.mxu0
        %v913 = vadd.f32 %v761, %v912
        %v914 = vpop.f32.mrf.mxu0
        %915 = vmatprep.mubr.bf16.mxu0 0
        %916 = vmatmul.mubr.bf16.gmra.mxu0 %v733
        %v917 = vpop.f32.mrf.mxu0
        %v918 = vadd.f32 %v761, %v917
        %v919 = vpop.f32.mrf.mxu0
        %v920 = vpop.f32.mrf.mxu0
        %v921 = vadd.f32 %v761, %v920
        %v922 = vpop.f32.mrf.mxu0
        %923 = vmatprep.mubr.bf16.mxu0 0
        %924 = vmatmul.mubr.bf16.gmra.mxu0 %v734
        %v925 = vpop.f32.mrf.mxu0
        %v926 = vadd.f32 %v761, %v925
        %v927 = vpop.f32.mrf.mxu0
        %v928 = vpop.f32.mrf.mxu0
        %v929 = vadd.f32 %v761, %v928
        %v930 = vpop.f32.mrf.mxu0
        %931 = vmatprep.mubr.bf16.mxu0 0
        %932 = vmatmul.mubr.bf16.gmra.mxu0 %v735
        %v933 = vpop.f32.mrf.mxu0
        %v934 = vadd.f32 %v761, %v933
        %v935 = vpop.f32.mrf.mxu0
        %v936 = vpop.f32.mrf.mxu0
        %v937 = vadd.f32 %v761, %v936
        %v938 = vpop.f32.mrf.mxu0
        %939 = vmatprep.mubr.bf16.mxu0 0
        %940 = vmatmul.mubr.bf16.gmra.mxu0 %v736
        %v941 = vpop.f32.mrf.mxu0
        %v942 = vadd.f32 %v761, %v941
        %v943 = vpop.f32.mrf.mxu0
        %v944 = vpop.f32.mrf.mxu0
        %v945 = vadd.f32 %v761, %v944
        %v946 = vpop.f32.mrf.mxu0
        %947 = vmatprep.mubr.bf16.mxu0 0
        %948 = vmatmul.mubr.bf16.gmra.mxu0 %v737
        %v949 = vpop.f32.mrf.mxu0
        %v950 = vadd.f32 %v761, %v949
        %v951 = vpop.f32.mrf.mxu0
        %v952 = vpop.f32.mrf.mxu0
        %v953 = vadd.f32 %v761, %v952
        %v954 = vpop.f32.mrf.mxu0
        %955 = vmatprep.mubr.bf16.mxu0 0
        %956 = vmatmul.mubr.bf16.gmra.mxu0 %v738
        %v957 = vpop.f32.mrf.mxu0
        %v958 = vadd.f32 %v761, %v957
        %v959 = vpop.f32.mrf.mxu0
        %v960 = vpop.f32.mrf.mxu0
        %v961 = vadd.f32 %v761, %v960
        %v962 = vpop.f32.mrf.mxu0
        %963 = vmatprep.mubr.bf16.mxu0 0
        %964 = vmatmul.mubr.bf16.gmra.mxu0 %v739
        %v965 = vpop.f32.mrf.mxu0
        %v966 = vadd.f32 %v761, %v965
        %v967 = vpop.f32.mrf.mxu0
        %v968 = vpop.f32.mrf.mxu0
        %v969 = vadd.f32 %v761, %v968
        %v970 = vpop.f32.mrf.mxu0
        %971 = vdwg.mxu0
        %972 = vst [vmem:[%s257] sm:$0xff] %v846
        %973 = vst [vmem:[%s257 + $0x8] sm:$0xff] %v849
        %974 = vst [vmem:[%s257 + $0x10] sm:$0xff] %v854
        %975 = vst [vmem:[%s257 + $0x18] sm:$0xff] %v857
        %976 = vst [vmem:[%s257 + $0x20] sm:$0xff] %v862
        %977 = vst [vmem:[%s257 + $0x28] sm:$0xff] %v865
        %978 = vst [vmem:[%s257 + $0x30] sm:$0xff] %v870
        %979 = vst [vmem:[%s257 + $0x38] sm:$0xff] %v873
        %980 = vst [vmem:[%s257 + $0x40] sm:$0xff] %v878
        %981 = vst [vmem:[%s257 + $0x48] sm:$0xff] %v881
        %982 = vst [vmem:[%s257 + $0x50] sm:$0xff] %v886
        %983 = vst [vmem:[%s257 + $0x58] sm:$0xff] %v889
        %984 = vst [vmem:[%s257 + $0x60] sm:$0xff] %v894
        %985 = vst [vmem:[%s257 + $0x68] sm:$0xff] %v897
        %986 = vst [vmem:[%s257 + $0x70] sm:$0xff] %v902
        %987 = vst [vmem:[%s257 + $0x78] sm:$0xff] %v905
        %988 = vst [vmem:[%s257 + $0x80] sm:$0xff] %v910
        %989 = vst [vmem:[%s257 + $0x88] sm:$0xff] %v913
        %990 = vst [vmem:[%s257 + $0x90] sm:$0xff] %v918
        %991 = vst [vmem:[%s257 + $0x98] sm:$0xff] %v921
        %992 = vst [vmem:[%s257 + $0xa0] sm:$0xff] %v926
        %993 = vst [vmem:[%s257 + $0xa8] sm:$0xff] %v929
        %994 = vst [vmem:[%s257 + $0xb0] sm:$0xff] %v934
        %995 = vst [vmem:[%s257 + $0xb8] sm:$0xff] %v937
        %996 = vst [vmem:[%s257 + $0xc0] sm:$0xff] %v942
        %997 = vst [vmem:[%s257 + $0xc8] sm:$0xff] %v945
        %998 = vst [vmem:[%s257 + $0xd0] sm:$0xff] %v950
        %999 = vst [vmem:[%s257 + $0xd8] sm:$0xff] %v953
        %1000 = vst [vmem:[%s257 + $0xe0] sm:$0xff] %v958
        %1001 = vst [vmem:[%s257 + $0xe8] sm:$0xff] %v961
        %1002 = vst [vmem:[%s257 + $0xf0] sm:$0xff] %v966
        %1003 = vst [vmem:[%s257 + $0xf8] sm:$0xff] %v969
        %s1004 = sand.u32 %s141, 1
        %s1005 = scalar_lea.sflag [#allocation4], %s1004
        %s1006 = sand.u32 %s141, 1
        %s1007 = smul.addr %s1006, 256
        %s1008 = scalar_lea.vmem [#allocation7], %s1007
        // Predicated region
        $region49: #{tpu_custom_call.1} parent=39 // pred_check
          %p1009 = pneg %p151
        $region50: #{tpu_custom_call.1} parent=39 // pred_check_branch
          %1011 = sbr.rel (%p1009) target = $region52
        $region51: #{tpu_custom_call.1} parent=39 // pred_region
          %s1012 = smul.u32 32, %s23
          %s1014 = ssub.s32 4096, 4096
          %1015 = vsyncadd %s1005, %s1014
          %s1016 = smul.addr %s1012, 128
          %s1017 = scalar_lea.hbm %s5, %s1016
          %s1018 = sshll.u32 %s1008, 4
          %s1019 = int_to_ptr.vmem [resolvable:$true] %s1018
          %1024 = dma.vmem_to_hbm [thread:$0]  %s1019, 4096, %s1017, %s1005, 128, 128, 8
        $region52: #{tpu_custom_call.1} parent=39 // pred_fallthru
          _
      $region40: #{tpu_custom_call.1} parent=5 // pred_fallthru
        _
      %p1025 = scmp.le.s32.totalorder 2, %s18
      // Predicated region
      $region53: #{tpu_custom_call.1} parent=5 // pred_check
        %p1026 = pneg %p1025
      $region54: #{tpu_custom_call.1} parent=5 // pred_check_branch
        %1028 = sbr.rel (%p1026) target = $region56
      $region55: #{tpu_custom_call.1} parent=5 // pred_region
        %s1029 = ssub.s32 %s18, 2
        // Predicated region
        $region57: #{tpu_custom_call.1} parent=55 // pred_check
          %p1030 = pneg %p157
        $region58: #{tpu_custom_call.1} parent=55 // pred_check_branch
          %1032 = sbr.rel (%p1030) target = $region60
        $region59: #{tpu_custom_call.1} parent=55 // pred_region
          %s1033 = sand.u32 %s142, 1
          %s1034 = scalar_lea.sflag [#allocation4], %s1033
          %s1035 = sand.u32 %s142, 1
          %s1036 = smul.addr %s1035, 256
          %s1037 = scalar_lea.vmem [#allocation7], %s1036
          %1038 = dma.done %s1034, 4096
        $region60: #{tpu_custom_call.1} parent=55 // pred_fallthru
          _
      $region56: #{tpu_custom_call.1} parent=5 // pred_fallthru
        _
    $region6: #{tpu_custom_call.1} parent=1 // loop_footer
      %s22 = sadd.s32 1, %s18
    $region7: #{tpu_custom_call.1} parent=1 // loop_footer_branch
      %17 = sbr.rel target = $region3
    $region8: #{tpu_custom_call.1} parent=1 // loop_exit
      _
    %1039 = vsyncpa [#allocation3], 1
    %s1040 = scalar_lea.sflag [#allocation3], 1
    %1041 = vsyncpa %s1040, 1
    %1042 = vsyncpa [#allocation6], 1
    %1043 = vsyncpa [#allocation4], 1
    %s1044 = scalar_lea.sflag [#allocation4], 1
    %1045 = vsyncpa %s1044, 1

</llo_original>
